<compile_context>
chip_gen: v5e
topology: v5e:2x2
jax: 0.10.0
libtpu: 0.0.40
codegen_flags: <defaults>
</compile_context>

<pallas_src>
import functools

import jax
import jax.numpy as jnp
from jax import lax
from jax.experimental import pallas as pl
from jax.experimental.pallas import tpu as pltpu

LANE = 128                    # lane width (last-dim grain)
SUBLANE = 8                   # f32 sublane grain (second-to-last dim)
TILE_BUDGET_BYTES = 4 << 20   # per input, per pipeline buffer (~4 MiB)
VMEM_LIMIT_BYTES = 32 << 20   # explicit scoped-VMEM limit (ok on v5e/v6e/v7x)


def _cdiv(a, b):
    return -(-a // b)


def _round_up(a, m):
    return _cdiv(a, m) * m


def _recip(x):
    """EUP approximate reciprocal + one Newton-Raphson step (~2^-24 rel err)."""
    r0 = pl.reciprocal(x, approx=True)
    return r0 * (jnp.float32(2.0) - x * r0)


def _row_loss(mse, dot, rr, oo):
    """Finalize the per-row loss from the four row-wise partial sums (f32)."""
    eps = jnp.float32(1e-12)                       # F.normalize default eps
    nr = jnp.maximum(jnp.sqrt(rr), eps)
    no = jnp.maximum(jnp.sqrt(oo), eps)
    cos = dot / (nr * no)
    return mse * ((jnp.float32(1.0) - cos) * jnp.float32(0.5) + jnp.float32(0.01))


def _partial_sums(r, o):
    """Row-wise partial sums for one (TB, TD) tile (inputs already f32)."""
    d = r - o
    o2 = o * o
    denom = o2 + jnp.float32(1e-15)
    mse = jnp.sum(d * d * _recip(denom), axis=-1, keepdims=True)
    dot = jnp.sum(r * o, axis=-1, keepdims=True)
    rr = jnp.sum(r * r, axis=-1, keepdims=True)
    oo = jnp.sum(o2, axis=-1, keepdims=True)
    return mse, dot, rr, oo


def _single_pass_kernel(r_ref, o_ref, out_ref):
    """Full-row tiles: one grid step per row tile, no scratch accumulators."""
    r = r_ref[...].astype(jnp.float32)
    o = o_ref[...].astype(jnp.float32)
    mse, dot, rr, oo = _partial_sums(r, o)
    out_ref[...] = _row_loss(mse, dot, rr, oo)


def _multi_pass_kernel(r_ref, o_ref, out_ref, mse_acc, dot_acc, rr_acc, oo_acc,
                       *, n_cols, tile_cols, mask_cols):
    """Huge-row path: column-tiled reduction with f32 row accumulators."""
    k = pl.program_id(1)

    @pl.when(k == 0)
    def _init():
        mse_acc[...] = jnp.zeros_like(mse_acc)
        dot_acc[...] = jnp.zeros_like(dot_acc)
        rr_acc[...] = jnp.zeros_like(rr_acc)
        oo_acc[...] = jnp.zeros_like(oo_acc)

    r = r_ref[...].astype(jnp.float32)
    o = o_ref[...].astype(jnp.float32)
    if mask_cols:  # static flag: only emitted when D % tile_cols != 0
        col = lax.broadcasted_iota(jnp.int32, r.shape, 1) + k * tile_cols
        valid = col < n_cols
        r = jnp.where(valid, r, jnp.float32(0.0))
        o = jnp.where(valid, o, jnp.float32(0.0))

    mse, dot, rr, oo = _partial_sums(r, o)
    mse_acc[...] += mse
    dot_acc[...] += dot
    rr_acc[...] += rr
    oo_acc[...] += oo

    @pl.when(k == pl.num_programs(1) - 1)
    def _finalize():
        out_ref[...] = _row_loss(mse_acc[...], dot_acc[...],
                                 rr_acc[...], oo_acc[...])


@functools.partial(jax.jit, static_argnames=("max_block_rows", "max_block_cols"))
def cosine_reconstruction_loss(reconstructed, origin, *,
                               max_block_rows=2048, max_block_cols=1 << 17):
    assert reconstructed.shape == origin.shape, (
        f"reconstructed.shape({reconstructed.shape}) should be equal to "
        f"origin.shape({origin.shape})"
    )
    # torch.einsum('bi,bi->b', ...) in the reference module requires 2-D input.
    assert reconstructed.ndim == 2, "CosineReconstructionLoss expects (B, D) inputs"
    B, D = reconstructed.shape
    itemsize = jnp.dtype(reconstructed.dtype).itemsize
    # Native sublane packing grain: 8 for f32, 16 for bf16, 32 for int8/fp8.
    row_grain = SUBLANE * max(1, 4 // itemsize)

    # ---- Column tiling: prefer the full row (contiguous DMA, one column step).
    col_cap = min(max_block_cols,
                  max(LANE, TILE_BUDGET_BYTES // (row_grain * itemsize)))
    if D <= col_cap:
        TD = D
    else:
        TD = max(LANE, (col_cap // LANE) * LANE)
        if TD >= D:
            TD = D
    grid_cols = _cdiv(D, TD)
    mask_cols = (grid_cols > 1) and (D % TD != 0)

    # ---- Row tiling: big tiles within budget, but keep >= 2 row tiles when B
    # allows so the "parallel" row axis shards across both v7x TensorCores.
    if B < 2 * row_grain:
        TB = B                                   # full-extent row block
    else:
        budget_rows = max(row_grain, TILE_BUDGET_BYTES // (TD * itemsize))
        TB = max(row_grain,
                 (min(max_block_rows, budget_rows) // row_grain) * row_grain)
        if 2 * TB > B:                           # would give 1 (or lopsided) tile
            TB = _round_up(_cdiv(B, 2), row_grain)
    grid_rows = _cdiv(B, TB)

    cost = pl.CostEstimate(
        flops=12 * B * D,
        transcendentals=B * D + 2 * B,           # per-element reciprocals + sqrt
        bytes_accessed=2 * B * D * itemsize + B * 4,
    )

    if grid_cols == 1:
        row_loss = pl.pallas_call(
            _single_pass_kernel,
            out_shape=jax.ShapeDtypeStruct((B, 1), jnp.float32),
            grid_spec=pltpu.PrefetchScalarGridSpec(
                num_scalar_prefetch=0,
                grid=(grid_rows,),
                in_specs=[pl.BlockSpec((TB, TD), lambda i: (i, 0)),
                          pl.BlockSpec((TB, TD), lambda i: (i, 0))],
                out_specs=pl.BlockSpec((TB, 1), lambda i: (i, 0)),
            ),
            compiler_params=pltpu.CompilerParams(
                dimension_semantics=("parallel",),
                vmem_limit_bytes=VMEM_LIMIT_BYTES,
            ),
            cost_estimate=cost,
        )(reconstructed, origin)
    else:
        kernel = functools.partial(_multi_pass_kernel,
                                   n_cols=D, tile_cols=TD, mask_cols=mask_cols)
        row_loss = pl.pallas_call(
            kernel,
            out_shape=jax.ShapeDtypeStruct((B, 1), jnp.float32),
            grid_spec=pltpu.PrefetchScalarGridSpec(
                num_scalar_prefetch=0,
                grid=(grid_rows, grid_cols),
                in_specs=[pl.BlockSpec((TB, TD), lambda i, k: (i, k)),
                          pl.BlockSpec((TB, TD), lambda i, k: (i, k))],
                out_specs=pl.BlockSpec((TB, 1), lambda i, k: (i, 0)),
                scratch_shapes=[pltpu.VMEM((TB, 1), jnp.float32)] * 4,
            ),
            compiler_params=pltpu.CompilerParams(
                dimension_semantics=("parallel", "arbitrary"),
                vmem_limit_bytes=VMEM_LIMIT_BYTES,
            ),
            cost_estimate=cost,
        )(reconstructed, origin)

    # Tiny finalize: mean over the true batch (OOB rows are never written).
    return jnp.mean(row_loss)


def _reference(r, o):
    """Pure-JAX reference matching the PyTorch module."""
    r = r.astype(jnp.float32)
    o = o.astype(jnp.float32)
    mse = jnp.sum((r - o) ** 2 / (o ** 2 + 1e-15), axis=-1)
    nr = jnp.maximum(jnp.sqrt(jnp.sum(r * r, axis=-1)), 1e-12)
    no = jnp.maximum(jnp.sqrt(jnp.sum(o * o, axis=-1)), 1e-12)
    cos = jnp.sum(r * o, axis=-1) / (nr * no)
    c = (1.0 - cos) * 0.5 + 0.01
    return jnp.mean(mse * c)


if __name__ == "__main__":
    key = jax.random.PRNGKey(0)
    k1, k2, k3, k4, k5, k6, k7, k8 = jax.random.split(key, 8)

    # Case 1: aligned (16, 512) f32, default config -> single-pass, 2 row tiles.
    r1 = jax.random.normal(k1, (16, 512), dtype=jnp.float32)
    o1 = jax.random.normal(k2, (16, 512), dtype=jnp.float32)
    loss1 = jax.block_until_ready(cosine_reconstruction_loss(r1, o1))
    ref1 = _reference(r1, o1)
    assert jnp.allclose(loss1, ref1, rtol=1e-4, atol=1e-6), (loss1, ref1)

    # Case 2: same data, forced small column tiles -> multi-pass reduction grid
    # (init / accumulate / finalize path), no column mask.
    loss2 = jax.block_until_ready(
        cosine_reconstruction_loss(r1, o1, max_block_rows=8, max_block_cols=128))
    assert jnp.allclose(loss2, ref1, rtol=1e-4, atol=1e-6), (loss2, ref1)

    # Case 3: ragged (6, 100) -> full-extent blocks, no wrapper padding.
    r3 = jax.random.normal(k3, (6, 100), dtype=jnp.float32)
    o3 = jax.random.normal(k4, (6, 100), dtype=jnp.float32)
    loss3 = jax.block_until_ready(cosine_reconstruction_loss(r3, o3))
    ref3 = _reference(r3, o3)
    assert jnp.allclose(loss3, ref3, rtol=1e-4, atol=1e-6), (loss3, ref3)

    # Case 4: bf16 inputs fed in native dtype (cast to f32 in-kernel).
    r4 = r1.astype(jnp.bfloat16)
    o4 = o1.astype(jnp.bfloat16)
    loss4 = jax.block_until_ready(cosine_reconstruction_loss(r4, o4))
    ref4 = _reference(r4, o4)
    assert jnp.allclose(loss4, ref4, rtol=1e-4, atol=1e-6), (loss4, ref4)

    # Case 5: ragged rows (20, 256) -> two row tiles, OOB rows masked on write.
    r5 = jax.random.normal(k5, (20, 256), dtype=jnp.float32)
    o5 = jax.random.normal(k6, (20, 256), dtype=jnp.float32)
    loss5 = jax.block_until_ready(cosine_reconstruction_loss(r5, o5))
    ref5 = _reference(r5, o5)
    assert jnp.allclose(loss5, ref5, rtol=1e-4, atol=1e-6), (loss5, ref5)

    # Case 6: ragged columns with forced column tiling -> in-kernel column mask.
    r6 = jax.random.normal(k7, (16, 300), dtype=jnp.float32)
    o6 = jax.random.normal(k8, (16, 300), dtype=jnp.float32)
    loss6 = jax.block_until_ready(
        cosine_reconstruction_loss(r6, o6, max_block_rows=8, max_block_cols=128))
    ref6 = _reference(r6, o6)
    assert jnp.allclose(loss6, ref6, rtol=1e-4, atol=1e-6), (loss6, ref6)

    print("KERNEL_OK")
</pallas_src>

<mosaic_0001>
module attributes {stable_mosaic.version = 11 : i64} {
  func.func @_single_pass_kernel(%arg0: i32, %arg1: memref<8x512xf32, #tpu.memory_space<vmem>>, %arg2: memref<8x512xf32, #tpu.memory_space<vmem>>, %arg3: memref<8x1xf32, #tpu.memory_space<vmem>>) attributes {dimension_semantics = [#tpu.dimension_semantics<parallel>], iteration_bounds = array<i64: 2>, scalar_prefetch = 0 : i64, scratch_operands = 0 : i64, tpu.core_type = #tpu.core_type<tc>, window_params = [{transform_indices = @transform_0, window_bounds = array<i64: 8, 512>}, {transform_indices = @transform_1, window_bounds = array<i64: 8, 512>}, {transform_indices = @transform_2, window_bounds = array<i64: 8, 1>}]} {
    %c0 = arith.constant 0 : index
    %c0_0 = arith.constant 0 : index
    %0 = vector.load %arg1[%c0, %c0_0] : memref<8x512xf32, #tpu.memory_space<vmem>>, vector<8x512xf32>
    %c0_1 = arith.constant 0 : index
    %c0_2 = arith.constant 0 : index
    %1 = vector.load %arg2[%c0_1, %c0_2] : memref<8x512xf32, #tpu.memory_space<vmem>>, vector<8x512xf32>
    %2 = arith.subf %0, %1 : vector<8x512xf32>
    %3 = arith.mulf %1, %1 : vector<8x512xf32>
    %cst = arith.constant 1.000000e-15 : f32
    %4 = vector.broadcast %cst : f32 to vector<8x512xf32>
    %5 = arith.addf %3, %4 : vector<8x512xf32>
    %6 = arith.mulf %2, %2 : vector<8x512xf32>
    %7 = tpu.reciprocal %5 {approx = true} : vector<8x512xf32> -> vector<8x512xf32>
    %8 = arith.mulf %5, %7 : vector<8x512xf32>
    %cst_3 = arith.constant 2.000000e+00 : f32
    %9 = vector.broadcast %cst_3 : f32 to vector<8x512xf32>
    %10 = arith.subf %9, %8 : vector<8x512xf32>
    %11 = arith.mulf %7, %10 : vector<8x512xf32>
    %12 = arith.mulf %6, %11 : vector<8x512xf32>
    %cst_4 = arith.constant dense<0.000000e+00> : vector<8xf32>
    %13 = vector.multi_reduction <add>, %12, %cst_4 [1] : vector<8x512xf32> to vector<8xf32>
    %14 = vector.shape_cast %13 : vector<8xf32> to vector<8x1xf32>
    %15 = arith.mulf %0, %1 : vector<8x512xf32>
    %cst_5 = arith.constant dense<0.000000e+00> : vector<8xf32>
    %16 = vector.multi_reduction <add>, %15, %cst_5 [1] : vector<8x512xf32> to vector<8xf32>
    %17 = vector.shape_cast %16 : vector<8xf32> to vector<8x1xf32>
    %18 = arith.mulf %0, %0 : vector<8x512xf32>
    %cst_6 = arith.constant dense<0.000000e+00> : vector<8xf32>
    %19 = vector.multi_reduction <add>, %18, %cst_6 [1] : vector<8x512xf32> to vector<8xf32>
    %20 = vector.shape_cast %19 : vector<8xf32> to vector<8x1xf32>
    %cst_7 = arith.constant dense<0.000000e+00> : vector<8xf32>
    %21 = vector.multi_reduction <add>, %3, %cst_7 [1] : vector<8x512xf32> to vector<8xf32>
    %22 = vector.shape_cast %21 : vector<8xf32> to vector<8x1xf32>
    %23 = math.sqrt %20 : vector<8x1xf32>
    %cst_8 = arith.constant 9.99999996E-13 : f32
    %24 = vector.broadcast %cst_8 : f32 to vector<8x1xf32>
    %25 = arith.maximumf %23, %24 : vector<8x1xf32>
    %26 = math.sqrt %22 : vector<8x1xf32>
    %cst_9 = arith.constant 9.99999996E-13 : f32
    %27 = vector.broadcast %cst_9 : f32 to vector<8x1xf32>
    %28 = arith.maximumf %26, %27 : vector<8x1xf32>
    %29 = arith.mulf %25, %28 : vector<8x1xf32>
    %30 = arith.divf %17, %29 : vector<8x1xf32>
    %cst_10 = arith.constant 1.000000e+00 : f32
    %31 = vector.broadcast %cst_10 : f32 to vector<8x1xf32>
    %32 = arith.subf %31, %30 : vector<8x1xf32>
    %cst_11 = arith.constant 5.000000e-01 : f32
    %33 = vector.broadcast %cst_11 : f32 to vector<8x1xf32>
    %34 = arith.mulf %32, %33 : vector<8x1xf32>
    %cst_12 = arith.constant 0.00999999977 : f32
    %35 = vector.broadcast %cst_12 : f32 to vector<8x1xf32>
    %36 = arith.addf %34, %35 : vector<8x1xf32>
    %37 = arith.mulf %14, %36 : vector<8x1xf32>
    %c0_13 = arith.constant 0 : index
    %c0_14 = arith.constant 0 : index
    %38 = vector.load %arg3[%c0_13, %c0_14] : memref<8x1xf32, #tpu.memory_space<vmem>>, vector<8x1xf32>
    tpu.vector_store %arg3[%c0_13, %c0_14], %37 {strides = array<i32>} : memref<8x1xf32, #tpu.memory_space<vmem>>, vector<8x1xf32>,
    return
  }
  func.func @transform_0(%arg0: i32) -> (i32, i32) {
    %c0_i32 = arith.constant 0 : i32
    %c0_i32_0 = arith.constant 0 : i32
    return %arg0, %c0_i32 : i32, i32
  }
  func.func @transform_1(%arg0: i32) -> (i32, i32) {
    %c0_i32 = arith.constant 0 : i32
    %c0_i32_0 = arith.constant 0 : i32
    return %arg0, %c0_i32 : i32, i32
  }
  func.func @transform_2(%arg0: i32) -> (i32, i32) {
    %c0_i32 = arith.constant 0 : i32
    %c0_i32_0 = arith.constant 0 : i32
    return %arg0, %c0_i32 : i32, i32
  }
}

</mosaic_0001>

<llo_original>
// kernel: cosine_reconstruction_loss.1
$region0: #{cosine_reconstruction_loss.1}
  #allocation0 [shape = 'u32[]', space=smem, size = 0x4, offset = 0x4, fixed_abs, tag = 'smem constant byte address 0x4 - core index']
  #allocation1 [shape = 'u32[72,128]{1,0:T(1,128)}', space=vmem, size = 0x9000, scoped, tag = 'internal scratch']
  %s0 = inlined_call_operand.hbm [shape: f32[16,512], index: 0, kind: input, shape index: {}]
  %s1 = inlined_call_operand.hbm [shape: f32[16,512], index: 1, kind: input, shape index: {}]
  %s2 = inlined_call_operand.vmem [shape: f32[16,1], index: 2, kind: output, shape index: {}]
  %s3 = sld [smem:[#allocation0]]
  $region49: #{cosine_reconstruction_loss.1} parent=0
    _
  %s5 = ssub.s32 1, %s3
  %s6 = scalar_select 0, %s5, %s3
  $region1: #{cosine_reconstruction_loss.1} parent=0
    #allocation2 [shape = 'u8[32768]{0}', space=vmem, size = 0x8000, scoped, tag = 'input window, operand 0']
    #allocation3 [shape = 's32[2]{0}', space=sflag, size = 0x8, scoped, tag = 'scoped memory for cosine_reconstruction_loss.1']
    #allocation4 [shape = 'u8[32768]{0}', space=vmem, size = 0x8000, scoped, tag = 'input window, operand 1']
    #allocation5 [shape = 's32[2]{0}', space=sflag, size = 0x8, scoped, tag = 'scoped memory for cosine_reconstruction_loss.1']
    %7 = vsyncpa [#allocation3], 0
    %s8 = scalar_lea.sflag [#allocation3], 1
    %9 = vsyncpa %s8, 0
    %10 = vsyncpa [#allocation5], 0
    %s11 = scalar_lea.sflag [#allocation5], 1
    %12 = vsyncpa %s11, 0
    loop: start=0, step=1, limit=4
    $region2: #{cosine_reconstruction_loss.1} parent=1 // loop_pre_header
      _
    $region3: #{cosine_reconstruction_loss.1} parent=1 // loop_header
      %s14 = sphi 0, %s18
      %p15 = scmp.ge.s32.totalorder %s14, 4
      %s24 = sphi 0, %s26
      %s27 = sphi 0, %s24
      %s28 = sphi 0, %s27
      %s44 = sphi 0, %s28
      %s50 = sphi 0, %s52
      %s53 = sphi 0, %s50
      %s54 = sphi 0, %s53
      %s70 = sphi 0, %s54
      %s76 = sphi 0, %s78
      %s79 = sphi 0, %s76
      %s80 = sphi 0, %s79
      %s96 = sphi 0, %s80
    $region4: #{cosine_reconstruction_loss.1} parent=1 // loop_header_branch
      %17 = sbr.rel (%p15) target = $region8
    $region5: #{cosine_reconstruction_loss.1} parent=1 // loop_body
      %s19 = ssub.s32 %s14, 1
      %s20 = ssub.s32 %s14, 2
      %s21 = sadd.s32 %s14, 1
      %s22 = ssub.s32 %s14, %s21
      %p23 = scmp.eq.s32.totalorder %s22, 0
      %s25 = sadd.s32 %s24, 1
      %s26 = scalar_select %p23, %s24, %s25
      %p29 = pneg %p23
      %p30 = scmp.eq.s32.totalorder %s14, 1
      %p31 = por %p29, %p30
      %p32 = scmp.ne.s32.totalorder %s24, %s27
      %p33 = scmp.eq.s32.totalorder %s14, 0
      %p34 = por %p32, %p33
      %p35 = scmp.ne.s32.totalorder %s24, %s27
      %p36 = scmp.eq.s32.totalorder %s19, 1
      %p37 = por %p35, %p36
      %p38 = scmp.ne.s32.totalorder %s27, %s28
      %p39 = scmp.eq.s32.totalorder %s19, 0
      %p40 = por %p38, %p39
      %p41 = scmp.ne.s32.totalorder %s27, %s28
      %p42 = scmp.eq.s32.totalorder %s20, 1
      %p43 = por %p41, %p42
      %p45 = scmp.ne.s32.totalorder %s28, %s44
      %p46 = scmp.eq.s32.totalorder %s20, 0
      %p47 = por %p45, %p46
      %s48 = ssub.s32 %s14, %s21
      %p49 = scmp.eq.s32.totalorder %s48, 0
      %s51 = sadd.s32 %s50, 1
      %s52 = scalar_select %p49, %s50, %s51
      %p55 = pneg %p49
      %p56 = scmp.eq.s32.totalorder %s14, 1
      %p57 = por %p55, %p56
      %p58 = scmp.ne.s32.totalorder %s50, %s53
      %p59 = scmp.eq.s32.totalorder %s14, 0
      %p60 = por %p58, %p59
      %p61 = scmp.ne.s32.totalorder %s50, %s53
      %p62 = scmp.eq.s32.totalorder %s19, 1
      %p63 = por %p61, %p62
      %p64 = scmp.ne.s32.totalorder %s53, %s54
      %p65 = scmp.eq.s32.totalorder %s19, 0
      %p66 = por %p64, %p65
      %p67 = scmp.ne.s32.totalorder %s53, %s54
      %p68 = scmp.eq.s32.totalorder %s20, 1
      %p69 = por %p67, %p68
      %p71 = scmp.ne.s32.totalorder %s54, %s70
      %p72 = scmp.eq.s32.totalorder %s20, 0
      %p73 = por %p71, %p72
      %s74 = ssub.s32 %s14, %s21
      %p75 = scmp.eq.s32.totalorder %s74, 0
      %s77 = sadd.s32 %s76, 1
      %s78 = scalar_select %p75, %s76, %s77
      %p81 = pneg %p75
      %p82 = scmp.eq.s32.totalorder %s14, 1
      %p83 = por %p81, %p82
      %p84 = scmp.ne.s32.totalorder %s76, %s79
      %p85 = scmp.eq.s32.totalorder %s14, 0
      %p86 = por %p84, %p85
      %p87 = scmp.ne.s32.totalorder %s76, %s79
      %p88 = scmp.eq.s32.totalorder %s19, 1
      %p89 = por %p87, %p88
      %p90 = scmp.ne.s32.totalorder %s79, %s80
      %p91 = scmp.eq.s32.totalorder %s19, 0
      %p92 = por %p90, %p91
      %p93 = scmp.ne.s32.totalorder %s79, %s80
      %p94 = scmp.eq.s32.totalorder %s20, 1
      %p95 = por %p93, %p94
      %p97 = scmp.ne.s32.totalorder %s80, %s96
      %p98 = scmp.eq.s32.totalorder %s20, 0
      %p99 = por %p97, %p98
      %p100 = scmp.le.s32.totalorder 1, %s14
      %p101 = scmp.lt.s32.totalorder %s14, 3
      %p102 = pnand %p100, %p101
      %p103 = pneg %p102
      // Predicated region
      $region9: #{cosine_reconstruction_loss.1} parent=5 // pred_check
        _
      $region10: #{cosine_reconstruction_loss.1} parent=5 // pred_check_branch
        %105 = sbr.rel (%p102) target = $region12
      $region11: #{cosine_reconstruction_loss.1} parent=5 // pred_region
        %s106 = ssub.s32 %s14, 1
      $region12: #{cosine_reconstruction_loss.1} parent=5 // pred_fallthru
        _
      %p107 = scmp.lt.s32.totalorder %s14, 2
      // Predicated region
      $region13: #{cosine_reconstruction_loss.1} parent=5 // pred_check
        %p108 = pneg %p107
      $region14: #{cosine_reconstruction_loss.1} parent=5 // pred_check_branch
        %110 = sbr.rel (%p108) target = $region16
      $region15: #{cosine_reconstruction_loss.1} parent=5 // pred_region
        // Predicated region
        $region17: #{cosine_reconstruction_loss.1} parent=15 // pred_check
          %p111 = pneg %p34
        $region18: #{cosine_reconstruction_loss.1} parent=15 // pred_check_branch
          %113 = sbr.rel (%p111) target = $region20
        $region19: #{cosine_reconstruction_loss.1} parent=15 // pred_region
          %s114 = sand.u32 %s24, 1
          %s115 = scalar_lea.sflag [#allocation3], %s114
          %s116 = sand.u32 %s24, 1
          %s117 = smul.addr %s116, 32
          %s118 = scalar_lea.vmem [#allocation2], %s117
          %120 = vsyncadd %s115, 0
          %s121 = smul.addr %s14, 4
          %s122 = smul.addr %s121, 8
          %s123 = scalar_lea.hbm %s0, %s122
          %s125 = sshll.u32 %s123, 4
          %s126 = int_to_ptr.hbm [resolvable:$true] %s125
          %s127 = sshll.u32 %s118, 4
          %s128 = int_to_ptr.vmem [resolvable:$true] %s127
          %130 = dma.hbm_to_vmem [thread:$0]  %s126, 512, %s128, %s115
        $region20: #{cosine_reconstruction_loss.1} parent=15 // pred_fallthru
          _
        // Predicated region
        $region21: #{cosine_reconstruction_loss.1} parent=15 // pred_check
          %p131 = pneg %p60
        $region22: #{cosine_reconstruction_loss.1} parent=15 // pred_check_branch
          %133 = sbr.rel (%p131) target = $region24
        $region23: #{cosine_reconstruction_loss.1} parent=15 // pred_region
          %s134 = sand.u32 %s50, 1
          %s135 = scalar_lea.sflag [#allocation5], %s134
          %s136 = sand.u32 %s50, 1
          %s137 = smul.addr %s136, 32
          %s138 = scalar_lea.vmem [#allocation4], %s137
          %140 = vsyncadd %s135, 0
          %s141 = smul.addr %s14, 4
          %s142 = smul.addr %s141, 8
          %s143 = scalar_lea.hbm %s1, %s142
          %s145 = sshll.u32 %s143, 4
          %s146 = int_to_ptr.hbm [resolvable:$true] %s145
          %s147 = sshll.u32 %s138, 4
          %s148 = int_to_ptr.vmem [resolvable:$true] %s147
          %150 = dma.hbm_to_vmem [thread:$0]  %s146, 512, %s148, %s135
        $region24: #{cosine_reconstruction_loss.1} parent=15 // pred_fallthru
          _
      $region16: #{cosine_reconstruction_loss.1} parent=5 // pred_fallthru
        _
      %p151 = scmp.le.s32.totalorder 1, %s14
      %p152 = scmp.lt.s32.totalorder %s14, 3
      %p153 = pnand %p151, %p152
      %p154 = pneg %p153
      // Predicated region
      $region25: #{cosine_reconstruction_loss.1} parent=5 // pred_check
        _
      $region26: #{cosine_reconstruction_loss.1} parent=5 // pred_check_branch
        %156 = sbr.rel (%p153) target = $region28
      $region27: #{cosine_reconstruction_loss.1} parent=5 // pred_region
        %s157 = ssub.s32 %s14, 1
        %s158 = sand.u32 %s27, 1
        %s159 = scalar_lea.sflag [#allocation3], %s158
        %s160 = sand.u32 %s27, 1
        %s161 = smul.addr %s160, 32
        %s162 = scalar_lea.vmem [#allocation2], %s161
        // Predicated region
        $region29: #{cosine_reconstruction_loss.1} parent=27 // pred_check
          %p163 = pneg %p40
        $region30: #{cosine_reconstruction_loss.1} parent=27 // pred_check_branch
          %165 = sbr.rel (%p163) target = $region32
        $region31: #{cosine_reconstruction_loss.1} parent=27 // pred_region
          %167 = dma.done %s159, 512
        $region32: #{cosine_reconstruction_loss.1} parent=27 // pred_fallthru
          _
        %s168 = sand.u32 %s53, 1
        %s169 = scalar_lea.sflag [#allocation5], %s168
        %s170 = sand.u32 %s53, 1
        %s171 = smul.addr %s170, 32
        %s172 = scalar_lea.vmem [#allocation4], %s171
        // Predicated region
        $region33: #{cosine_reconstruction_loss.1} parent=27 // pred_check
          %p173 = pneg %p66
        $region34: #{cosine_reconstruction_loss.1} parent=27 // pred_check_branch
          %175 = sbr.rel (%p173) target = $region36
        $region35: #{cosine_reconstruction_loss.1} parent=27 // pred_region
          %177 = dma.done %s169, 512
        $region36: #{cosine_reconstruction_loss.1} parent=27 // pred_fallthru
          _
        %s178 = sand.u32 %s27, 1
        %s179 = scalar_lea.sflag [#allocation3], %s178
        %s180 = sand.u32 %s27, 1
        %s181 = smul.addr %s180, 32
        %s182 = scalar_lea.vmem [#allocation2], %s181
        %p183 = pneg %p40
        %p184 = pneg %p37
        %s185 = sand.u32 %s53, 1
        %s186 = scalar_lea.sflag [#allocation5], %s185
        %s187 = sand.u32 %s53, 1
        %s188 = smul.addr %s187, 32
        %s189 = scalar_lea.vmem [#allocation4], %s188
        %p190 = pneg %p66
        %p191 = pneg %p63
        %p192 = pneg %p92
        %p193 = pneg %p89
        %p194 = scmp.lt.s32.totalorder %s19, 1
        %s195 = scalar_select %p194, %s19, 1
        %s196 = smul.addr %s195, 8
        %s197 = scalar_lea.vmem %s2, %s196
        %p198 = scmp.lt.s32.totalorder %s19, 1
        %s199 = scalar_select %p198, %s19, 1
        %s200 = smul.addr %s199, 8
        %s201 = scalar_lea.vmem %s2, %s200
        %v202 = vld [vmem:[%s162] sm:$0xff]
        %v203 = vld [vmem:[%s162 + $0x8] sm:$0xff]
        %v204 = vld [vmem:[%s162 + $0x10] sm:$0xff]
        %v205 = vld [vmem:[%s162 + $0x18] sm:$0xff]
        %v206 = vld [vmem:[%s172] sm:$0xff]
        %v207 = vld [vmem:[%s172 + $0x8] sm:$0xff]
        %v208 = vld [vmem:[%s172 + $0x10] sm:$0xff]
        %v209 = vld [vmem:[%s172 + $0x18] sm:$0xff]
        %v210 = vsub.f32 %v202, %v206
        %v211 = vsub.f32 %v203, %v207
        %v212 = vsub.f32 %v204, %v208
        %v213 = vsub.f32 %v205, %v209
        %v214 = vmul.f32 %v206, %v206
        %v215 = vmul.f32 %v207, %v207
        %v216 = vmul.f32 %v208, %v208
        %v217 = vmul.f32 %v209, %v209
        %v218 = vadd.f32 %v214, 1e-15
        %v219 = vadd.f32 %v215, 1e-15
        %v220 = vadd.f32 %v216, 1e-15
        %v221 = vadd.f32 %v217, 1e-15
        %v222 = vmul.f32 %v210, %v210
        %v223 = vmul.f32 %v211, %v211
        %v224 = vmul.f32 %v212, %v212
        %v225 = vmul.f32 %v213, %v213
        %v226 = vrcp.pop %v218
        %v227 = vrcp.pop %v219
        %v228 = vrcp.pop %v220
        %v229 = vrcp.pop %v221
        %v230 = vmul.f32 %v218, %v226
        %v231 = vmul.f32 %v219, %v227
        %v232 = vmul.f32 %v220, %v228
        %v233 = vmul.f32 %v221, %v229
        %v234 = vsub.f32 2.0, %v230
        %v235 = vsub.f32 2.0, %v231
        %v236 = vsub.f32 2.0, %v232
        %v237 = vsub.f32 2.0, %v233
        %v238 = vmul.f32 %v226, %v234
        %v239 = vmul.f32 %v227, %v235
        %v240 = vmul.f32 %v228, %v236
        %v241 = vmul.f32 %v229, %v237
        %v242 = vmul.f32 %v222, %v238
        %v243 = vmul.f32 %v223, %v239
        %v244 = vmul.f32 %v224, %v240
        %v245 = vmul.f32 %v225, %v241
        %v246 = vadd.f32 %v242, %v243
        %v247 = vadd.f32 %v246, %v244
        %v248 = vadd.f32 %v247, %v245
        %249 = vadd.xlane.f32.xlu0 %v248
        %v250 = vpop.xlane.xlu0 %249
        %v251 = vmul.f32 %v202, %v206
        %v252 = vmul.f32 %v203, %v207
        %v253 = vmul.f32 %v204, %v208
        %v254 = vmul.f32 %v205, %v209
        %v255 = vadd.f32 %v251, %v252
        %v256 = vadd.f32 %v255, %v253
        %v257 = vadd.f32 %v256, %v254
        %258 = vadd.xlane.f32.xlu0 %v257
        %v259 = vpop.xlane.xlu0 %258
        %v260 = vmul.f32 %v202, %v202
        %v261 = vmul.f32 %v203, %v203
        %v262 = vmul.f32 %v204, %v204
        %v263 = vmul.f32 %v205, %v205
        %v264 = vadd.f32 %v260, %v261
        %v265 = vadd.f32 %v264, %v262
        %v266 = vadd.f32 %v265, %v263
        %267 = vadd.xlane.f32.xlu0 %v266
        %v268 = vpop.xlane.xlu0 %267
        %v269 = vadd.f32 %v214, %v215
        %v270 = vadd.f32 %v269, %v216
        %v271 = vadd.f32 %v270, %v217
        %272 = vadd.xlane.f32.xlu0 %v271
        %v273 = vpop.xlane.xlu0 %272
        %v274 = vrsqrt.pop %v268
        %v275 = vmul.f32 %v274, %v268
        %v276 = vmul.f32 %v275, %v274
        %v277 = vmul.f32 0.5, %v276
        %v278 = vsub.f32 1.5, %v277
        %v279 = vmul.f32 %v274, %v278
        %v280 = vmul.f32 %v268, %v279
        %vm281 = vcmp.eq.f32.partialorder %v268, inf
        %v282 = vsel %vm281, %v268, %v280
        %vm283 = vcmp.eq.f32.partialorder %v268, 0.0
        %v284 = vand.u32 %v268, 2147483648
        %v285 = vsel %vm283, %v284, %v282
        %v286 = vmax.f32 %v285, 1e-12
        %v287 = vrsqrt.pop %v273
        %v288 = vmul.f32 %v287, %v273
        %v289 = vmul.f32 %v288, %v287
        %v290 = vmul.f32 0.5, %v289
        %v291 = vsub.f32 1.5, %v290
        %v292 = vmul.f32 %v287, %v291
        %v293 = vmul.f32 %v273, %v292
        %vm294 = vcmp.eq.f32.partialorder %v273, inf
        %v295 = vsel %vm294, %v273, %v293
        %vm296 = vcmp.eq.f32.partialorder %v273, 0.0
        %v297 = vand.u32 %v273, 2147483648
        %v298 = vsel %vm296, %v297, %v295
        %v299 = vmax.f32 %v298, 1e-12
        %v300 = vmul.f32 %v286, %v299
        %v301 = vrcp.pop %v300
        %v302 = vmul.f32 %v300, %v301
        %v303 = vsub.f32 1.0, %v302
        %v304 = vmul.f32 %v301, %v303
        %v305 = vadd.f32 %v301, %v304
        %vm306 = vweird.f32 %v300
        %vm307 = vweird.f32 %v301
        %vm308 = vmor %vm306, %vm307
        %v309 = vsel %vm308, %v301, %v305
        %v310 = vand.u32 2147483647, %v300
        %vm311 = vcmp.eq.f32.partialorder %v310, 8.507059e+37
        %v312 = vand.u32 %v300, 2147483648
        %v313 = vor.u32 1.1754944e-38, %v312
        %v314 = vsel %vm311, %v313, %v309
        %v315 = vmul.f32 %v259, %v314
        %v316 = vsub.f32 1.0, %v315
        %v317 = vmul.f32 %v316, 0.5
        %v318 = vadd.f32 %v317, 0.01
        %v319 = vmul.f32 %v250, %v318
        %vm320 = vcmask 7168
        %321 = vst.msk [vmem:[%s201] sm:$0xff] %vm320, %v319
        %p322 = scmp.lt.s32.totalorder %s19, 1
        %s323 = scalar_select %p322, %s19, 1
        %s324 = smul.addr %s323, 8
        %s325 = scalar_lea.vmem %s2, %s324
        // Predicated region
        $region37: #{cosine_reconstruction_loss.1} parent=27 // pred_check
          %p326 = pneg %p89
        $region38: #{cosine_reconstruction_loss.1} parent=27 // pred_check_branch
          %328 = sbr.rel (%p326) target = $region40
        $region39: #{cosine_reconstruction_loss.1} parent=27 // pred_region
          _
        $region40: #{cosine_reconstruction_loss.1} parent=27 // pred_fallthru
          _
      $region28: #{cosine_reconstruction_loss.1} parent=5 // pred_fallthru
        _
      %p329 = scmp.le.s32.totalorder 2, %s14
      // Predicated region
      $region41: #{cosine_reconstruction_loss.1} parent=5 // pred_check
        %p330 = pneg %p329
      $region42: #{cosine_reconstruction_loss.1} parent=5 // pred_check_branch
        %332 = sbr.rel (%p330) target = $region44
      $region43: #{cosine_reconstruction_loss.1} parent=5 // pred_region
        %s333 = ssub.s32 %s14, 2
        // Predicated region
        $region45: #{cosine_reconstruction_loss.1} parent=43 // pred_check
          %p334 = pneg %p95
        $region46: #{cosine_reconstruction_loss.1} parent=43 // pred_check_branch
          %336 = sbr.rel (%p334) target = $region48
        $region47: #{cosine_reconstruction_loss.1} parent=43 // pred_region
          %p337 = scmp.lt.s32.totalorder %s20, 1
          %s338 = scalar_select %p337, %s20, 1
          %s339 = smul.addr %s338, 8
          %s340 = scalar_lea.vmem %s2, %s339
        $region48: #{cosine_reconstruction_loss.1} parent=43 // pred_fallthru
          _
      $region44: #{cosine_reconstruction_loss.1} parent=5 // pred_fallthru
        _
    $region6: #{cosine_reconstruction_loss.1} parent=1 // loop_footer
      %s18 = sadd.s32 1, %s14
    $region7: #{cosine_reconstruction_loss.1} parent=1 // loop_footer_branch
      %13 = sbr.rel target = $region3
    $region8: #{cosine_reconstruction_loss.1} parent=1 // loop_exit
      _
    %341 = vsyncpa [#allocation3], 1
    %s342 = scalar_lea.sflag [#allocation3], 1
    %343 = vsyncpa %s342, 1
    %344 = vsyncpa [#allocation5], 1
    %s345 = scalar_lea.sflag [#allocation5], 1
    %346 = vsyncpa %s345, 1

</llo_original>
